<compile_context>
chip_gen: v5e
topology: v5e:2x2
jax: 0.10.0
libtpu: 0.0.40
codegen_flags: <defaults>
</compile_context>

<pallas_src>
import math

import jax
import jax.numpy as jnp
from jax.experimental import pallas as pl
from jax.experimental.pallas import tpu as pltpu

NUM_CLASSES = 6      # len(activities_names) -- synthetic choice (6 HAR activities)
IN_FEATURES = 300    # 3 channels x 100 timesteps
H1 = 100
H2 = 50

# Lane-padded sizes (multiples of 128 on the lane axis). K (=300) is NOT padded:
# Mosaic handles the non-aligned contraction, and x streams unpadded from HBM.
H1_PAD = 128
H2_PAD = 128
OUT_PAD = 128

MAX_TB = 1024        # batch-tile rows; x tile 2 x ~1.5 MiB + out 2 x 256 KiB
                     # + resident weights ~150 KiB  ->  ~3.5 MiB VMEM total
MIN_GRID_STEPS = 4   # keep >=4 grid steps when B allows (v7x: feeds both TCs)


def _round_up(n, m):
    return ((n + m - 1) // m) * m


def _mlp_kernel(x_ref, w1_ref, b1_ref, w2_ref, b2_ref, w3_ref, b3_ref, o_ref):
    """One batch tile: three MXU matmuls + f32 bias/ReLU, bf16 lane-dense store.

    Weights/biases use constant index_maps so they stay VMEM-resident across
    all grid steps; only the x tile and the output tile stream per step.
    """
    x = x_ref[...].astype(w1_ref.dtype)                              # (TB, 300) bf16 (VPU cast, free)
    h1 = jnp.dot(x, w1_ref[...], preferred_element_type=jnp.float32) + b1_ref[...]
    h1 = jnp.maximum(h1, 0.0).astype(w2_ref.dtype)                   # ReLU in f32, back to bf16
    h2 = jnp.dot(h1, w2_ref[...], preferred_element_type=jnp.float32) + b2_ref[...]
    h2 = jnp.maximum(h2, 0.0).astype(w3_ref.dtype)                   # ReLU in f32, back to bf16
    logits = jnp.dot(h2, w3_ref[...], preferred_element_type=jnp.float32) + b3_ref[...]
    o_ref[...] = logits.astype(o_ref.dtype)                          # (TB, 128) bf16, lane-dense vst


def _pad_params(params, compute_dtype):
    """Zero-pad (in,out) weights / (1,out) biases on the padded dims only."""
    w1, b1, w2, b2, w3, b3 = params

    def pad_w(w, rows, cols):
        return jnp.pad(w, ((0, rows - w.shape[0]), (0, cols - w.shape[1]))
                       ).astype(compute_dtype)

    def pad_b(b, cols):
        return jnp.pad(b, ((0, 0), (0, cols - b.shape[1]))).astype(jnp.float32)

    return (pad_w(w1, IN_FEATURES, H1_PAD), pad_b(b1, H1_PAD),   # W1: only out-dim padded
            pad_w(w2, H1_PAD, H2_PAD), pad_b(b2, H2_PAD),
            pad_w(w3, H2_PAD, OUT_PAD), pad_b(b3, OUT_PAD))


def sensor_nn_forward(x, params, compute_dtype=jnp.bfloat16):
    """x: (B, C, L) float32 with C*L == 300. Returns (B, NUM_CLASSES) float32."""
    B = x.shape[0]
    x_flat = x.reshape(B, -1)                                        # nn.Flatten(); no copy
    assert x_flat.shape[1] == IN_FEATURES

    # Batch tile: large enough to amortize per-step pipeline overhead, small
    # enough to keep >=MIN_GRID_STEPS grid steps when B allows (v7x megacore).
    TB = min(MAX_TB, max(8, _round_up(pl.cdiv(B, MIN_GRID_STEPS), 8)))
    grid_steps = pl.cdiv(B, TB)                                      # partial last block OK

    w1p, b1p, w2p, b2p, w3p, b3p = _pad_params(params, compute_dtype)

    flops = 2 * grid_steps * TB * (
        IN_FEATURES * H1_PAD + H1_PAD * H2_PAD + H2_PAD * OUT_PAD)
    bytes_accessed = (
        B * IN_FEATURES * 4                                            # x stream (f32)
        + (IN_FEATURES * H1_PAD + H1_PAD * H2_PAD + H2_PAD * OUT_PAD) * 2  # bf16 weights
        + (H1_PAD + H2_PAD + OUT_PAD) * 4                              # f32 biases
        + B * OUT_PAD * 2)                                             # bf16 logits

    out = pl.pallas_call(
        _mlp_kernel,
        out_shape=jax.ShapeDtypeStruct((B, OUT_PAD), jnp.bfloat16),
        grid_spec=pltpu.PrefetchScalarGridSpec(
            num_scalar_prefetch=0,
            grid=(grid_steps,),
            in_specs=[
                # x: streamed per tile; last dim 300 == full array dim (legal).
                # TODO(synk): optionally sweep pipeline_mode=pl.Buffered(3) here
                # once TB is fixed, if a profile shows exposed DMA-wait gaps.
                pl.BlockSpec((TB, IN_FEATURES), lambda i: (i, 0)),
                pl.BlockSpec((IN_FEATURES, H1_PAD), lambda i: (0, 0)),  # W1: resident
                pl.BlockSpec((1, H1_PAD), lambda i: (0, 0)),            # b1: resident
                pl.BlockSpec((H1_PAD, H2_PAD), lambda i: (0, 0)),       # W2: resident
                pl.BlockSpec((1, H2_PAD), lambda i: (0, 0)),            # b2: resident
                pl.BlockSpec((H2_PAD, OUT_PAD), lambda i: (0, 0)),      # W3: resident
                pl.BlockSpec((1, OUT_PAD), lambda i: (0, 0)),           # b3: resident
            ],
            out_specs=pl.BlockSpec((TB, OUT_PAD), lambda i: (i, 0)),
        ),
        compiler_params=pltpu.CompilerParams(
            dimension_semantics=("parallel",)),                     # megacore batch split on v7x
        cost_estimate=pl.CostEstimate(
            flops=flops, transcendentals=0, bytes_accessed=bytes_accessed),
    )(x_flat, w1p, b1p, w2p, b2p, w3p, b3p)

    # Strip class padding (padded W3/b3 columns are exactly zero) and upcast.
    return out[:, :NUM_CLASSES].astype(jnp.float32)


def init_params(key):
    """PyTorch-default Linear init: kaiming_uniform(a=sqrt(5)) which reduces to
    U(-1/sqrt(fan_in), 1/sqrt(fan_in)) for weights and biases. Weights stored
    as (in, out); biases as (1, out)."""
    def linear(key, fan_in, fan_out):
        kw, kb = jax.random.split(key)
        bound = 1.0 / math.sqrt(fan_in)
        w = jax.random.uniform(kw, (fan_in, fan_out), jnp.float32, -bound, bound)
        b = jax.random.uniform(kb, (1, fan_out), jnp.float32, -bound, bound)
        return w, b

    k1, k2, k3 = jax.random.split(key, 3)
    w1, b1 = linear(k1, IN_FEATURES, H1)
    w2, b2 = linear(k2, H1, H2)
    w3, b3 = linear(k3, H2, NUM_CLASSES)
    return (w1, b1, w2, b2, w3, b3)


def _reference_forward(x, params, compute_dtype=jnp.bfloat16):
    """Pure-JAX reference with identical bf16-input / f32-accum / bf16-out numerics."""
    w1, b1, w2, b2, w3, b3 = params
    h = x.reshape(x.shape[0], -1).astype(compute_dtype)
    h = jnp.dot(h, w1.astype(compute_dtype),
                preferred_element_type=jnp.float32) + b1
    h = jnp.maximum(h, 0.0).astype(compute_dtype)
    h = jnp.dot(h, w2.astype(compute_dtype),
                preferred_element_type=jnp.float32) + b2
    h = jnp.maximum(h, 0.0).astype(compute_dtype)
    logits = jnp.dot(h, w3.astype(compute_dtype),
                     preferred_element_type=jnp.float32) + b3
    return logits.astype(compute_dtype).astype(jnp.float32)


if __name__ == "__main__":
    key = jax.random.PRNGKey(0)
    k_params, k_x = jax.random.split(key)

    params = init_params(k_params)
    # Small sensor batch: batch=2, 3 channels, 100 timesteps -> flattens to 300.
    x = jax.random.normal(k_x, (2, 3, 100), dtype=jnp.float32)

    logits = sensor_nn_forward(x, params)
    jax.block_until_ready(logits)

    ref = _reference_forward(x, params)
    assert logits.shape == (2, NUM_CLASSES)
    max_diff = float(jnp.max(jnp.abs(logits - ref)))
    # bf16 output granularity (~1 ulp of values ~O(1)) dominates the tolerance.
    assert jnp.allclose(logits, ref, atol=2e-2, rtol=2e-2), ("max abs diff:", max_diff)

    print("KERNEL_OK")
</pallas_src>

<mosaic_0001>
module attributes {stable_mosaic.version = 11 : i64} {
  func.func @_mlp_kernel(%arg0: i32, %arg1: memref<8x300xf32, #tpu.memory_space<vmem>>, %arg2: memref<300x128xbf16, #tpu.memory_space<vmem>>, %arg3: memref<1x128xf32, #tpu.memory_space<vmem>>, %arg4: memref<128x128xbf16, #tpu.memory_space<vmem>>, %arg5: memref<1x128xf32, #tpu.memory_space<vmem>>, %arg6: memref<128x128xbf16, #tpu.memory_space<vmem>>, %arg7: memref<1x128xf32, #tpu.memory_space<vmem>>, %arg8: memref<8x128xbf16, #tpu.memory_space<vmem>>) attributes {dimension_semantics = [#tpu.dimension_semantics<parallel>], iteration_bounds = array<i64: 1>, scalar_prefetch = 0 : i64, scratch_operands = 0 : i64, tpu.core_type = #tpu.core_type<tc>, window_params = [{transform_indices = @transform_0, window_bounds = array<i64: 8, 300>}, {pipeline_mode = #tpu.pipeline_mode<synchronous>, transform_indices = @transform_1, window_bounds = array<i64: 300, 128>}, {pipeline_mode = #tpu.pipeline_mode<synchronous>, transform_indices = @transform_2, window_bounds = array<i64: 1, 128>}, {pipeline_mode = #tpu.pipeline_mode<synchronous>, transform_indices = @transform_3, window_bounds = array<i64: 128, 128>}, {pipeline_mode = #tpu.pipeline_mode<synchronous>, transform_indices = @transform_4, window_bounds = array<i64: 1, 128>}, {pipeline_mode = #tpu.pipeline_mode<synchronous>, transform_indices = @transform_5, window_bounds = array<i64: 128, 128>}, {pipeline_mode = #tpu.pipeline_mode<synchronous>, transform_indices = @transform_6, window_bounds = array<i64: 1, 128>}, {transform_indices = @transform_7, window_bounds = array<i64: 8, 128>}]} {
    %c0 = arith.constant 0 : index
    %c0_0 = arith.constant 0 : index
    %0 = vector.load %arg1[%c0, %c0_0] : memref<8x300xf32, #tpu.memory_space<vmem>>, vector<8x300xf32>
    %1 = arith.truncf %0 : vector<8x300xf32> to vector<8x300xbf16>
    %c0_1 = arith.constant 0 : index
    %c0_2 = arith.constant 0 : index
    %2 = vector.load %arg2[%c0_1, %c0_2] : memref<300x128xbf16, #tpu.memory_space<vmem>>, vector<300x128xbf16>
    %cst = arith.constant dense<0.000000e+00> : vector<8x128xf32>
    %3 = tpu.matmul %1, %2, %cst {dimension_numbers = #tpu.dot_dimension_numbers<[1], [0], [0], [1], [0, 0, 1, 1], [], []>} : vector<8x300xbf16>, vector<300x128xbf16>, vector<8x128xf32> -> vector<8x128xf32>
    %c0_3 = arith.constant 0 : index
    %c0_4 = arith.constant 0 : index
    %4 = vector.load %arg3[%c0_3, %c0_4] : memref<1x128xf32, #tpu.memory_space<vmem>>, vector<1x128xf32>
    %5 = vector.broadcast %4 : vector<1x128xf32> to vector<8x128xf32>
    %6 = arith.addf %3, %5 : vector<8x128xf32>
    %cst_5 = arith.constant 0.000000e+00 : f32
    %7 = vector.broadcast %cst_5 : f32 to vector<8x128xf32>
    %8 = arith.maximumf %6, %7 : vector<8x128xf32>
    %9 = arith.truncf %8 : vector<8x128xf32> to vector<8x128xbf16>
    %c0_6 = arith.constant 0 : index
    %c0_7 = arith.constant 0 : index
    %10 = vector.load %arg4[%c0_6, %c0_7] : memref<128x128xbf16, #tpu.memory_space<vmem>>, vector<128x128xbf16>
    %cst_8 = arith.constant dense<0.000000e+00> : vector<8x128xf32>
    %11 = tpu.matmul %9, %10, %cst_8 {dimension_numbers = #tpu.dot_dimension_numbers<[1], [0], [0], [1], [0, 0, 1, 1], [], []>} : vector<8x128xbf16>, vector<128x128xbf16>, vector<8x128xf32> -> vector<8x128xf32>
    %c0_9 = arith.constant 0 : index
    %c0_10 = arith.constant 0 : index
    %12 = vector.load %arg5[%c0_9, %c0_10] : memref<1x128xf32, #tpu.memory_space<vmem>>, vector<1x128xf32>
    %13 = vector.broadcast %12 : vector<1x128xf32> to vector<8x128xf32>
    %14 = arith.addf %11, %13 : vector<8x128xf32>
    %cst_11 = arith.constant 0.000000e+00 : f32
    %15 = vector.broadcast %cst_11 : f32 to vector<8x128xf32>
    %16 = arith.maximumf %14, %15 : vector<8x128xf32>
    %17 = arith.truncf %16 : vector<8x128xf32> to vector<8x128xbf16>
    %c0_12 = arith.constant 0 : index
    %c0_13 = arith.constant 0 : index
    %18 = vector.load %arg6[%c0_12, %c0_13] : memref<128x128xbf16, #tpu.memory_space<vmem>>, vector<128x128xbf16>
    %cst_14 = arith.constant dense<0.000000e+00> : vector<8x128xf32>
    %19 = tpu.matmul %17, %18, %cst_14 {dimension_numbers = #tpu.dot_dimension_numbers<[1], [0], [0], [1], [0, 0, 1, 1], [], []>} : vector<8x128xbf16>, vector<128x128xbf16>, vector<8x128xf32> -> vector<8x128xf32>
    %c0_15 = arith.constant 0 : index
    %c0_16 = arith.constant 0 : index
    %20 = vector.load %arg7[%c0_15, %c0_16] : memref<1x128xf32, #tpu.memory_space<vmem>>, vector<1x128xf32>
    %21 = vector.broadcast %20 : vector<1x128xf32> to vector<8x128xf32>
    %22 = arith.addf %19, %21 : vector<8x128xf32>
    %23 = arith.truncf %22 : vector<8x128xf32> to vector<8x128xbf16>
    %c0_17 = arith.constant 0 : index
    %c0_18 = arith.constant 0 : index
    %24 = vector.load %arg8[%c0_17, %c0_18] : memref<8x128xbf16, #tpu.memory_space<vmem>>, vector<8x128xbf16>
    tpu.vector_store %arg8[%c0_17, %c0_18], %23 {strides = array<i32>} : memref<8x128xbf16, #tpu.memory_space<vmem>>, vector<8x128xbf16>,
    return
  }
  func.func @transform_0(%arg0: i32) -> (i32, i32) {
    %c0_i32 = arith.constant 0 : i32
    %c0_i32_0 = arith.constant 0 : i32
    return %arg0, %c0_i32 : i32, i32
  }
  func.func @transform_1(%arg0: i32) -> (i32, i32) {
    %c0_i32 = arith.constant 0 : i32
    %c0_i32_0 = arith.constant 0 : i32
    %c0_i32_1 = arith.constant 0 : i32
    return %c0_i32, %c0_i32_0 : i32, i32
  }
  func.func @transform_2(%arg0: i32) -> (i32, i32) {
    %c0_i32 = arith.constant 0 : i32
    %c0_i32_0 = arith.constant 0 : i32
    %c0_i32_1 = arith.constant 0 : i32
    return %c0_i32, %c0_i32_0 : i32, i32
  }
  func.func @transform_3(%arg0: i32) -> (i32, i32) {
    %c0_i32 = arith.constant 0 : i32
    %c0_i32_0 = arith.constant 0 : i32
    %c0_i32_1 = arith.constant 0 : i32
    return %c0_i32, %c0_i32_0 : i32, i32
  }
  func.func @transform_4(%arg0: i32) -> (i32, i32) {
    %c0_i32 = arith.constant 0 : i32
    %c0_i32_0 = arith.constant 0 : i32
    %c0_i32_1 = arith.constant 0 : i32
    return %c0_i32, %c0_i32_0 : i32, i32
  }
  func.func @transform_5(%arg0: i32) -> (i32, i32) {
    %c0_i32 = arith.constant 0 : i32
    %c0_i32_0 = arith.constant 0 : i32
    %c0_i32_1 = arith.constant 0 : i32
    return %c0_i32, %c0_i32_0 : i32, i32
  }
  func.func @transform_6(%arg0: i32) -> (i32, i32) {
    %c0_i32 = arith.constant 0 : i32
    %c0_i32_0 = arith.constant 0 : i32
    %c0_i32_1 = arith.constant 0 : i32
    return %c0_i32, %c0_i32_0 : i32, i32
  }
  func.func @transform_7(%arg0: i32) -> (i32, i32) {
    %c0_i32 = arith.constant 0 : i32
    %c0_i32_0 = arith.constant 0 : i32
    return %arg0, %c0_i32 : i32, i32
  }
}

</mosaic_0001>

<llo_original>
// kernel: tpu_custom_call.1
$region0: #{tpu_custom_call.1}
  #allocation0 [shape = 'u32[]', space=smem, size = 0x4, offset = 0x4, fixed_abs, tag = 'smem constant byte address 0x4 - core index']
  #allocation1 [shape = 'u32[72,128]{1,0:T(1,128)}', space=vmem, size = 0x9000, scoped, tag = 'internal scratch']
  %s0 = inlined_call_operand.hbm [shape: f32[2,300], index: 0, kind: input, shape index: {}]
  %s1 = inlined_call_operand.hbm [shape: bf16[300,128], index: 1, kind: input, shape index: {}]
  %s2 = inlined_call_operand.vmem [shape: f32[1,128], index: 2, kind: input, shape index: {}]
  %s3 = inlined_call_operand.hbm [shape: bf16[128,128], index: 3, kind: input, shape index: {}]
  %s4 = inlined_call_operand.vmem [shape: f32[1,128], index: 4, kind: input, shape index: {}]
  %s5 = inlined_call_operand.hbm [shape: bf16[128,128], index: 5, kind: input, shape index: {}]
  %s6 = inlined_call_operand.vmem [shape: f32[1,128], index: 6, kind: input, shape index: {}]
  %s7 = inlined_call_operand.hbm [shape: bf16[2,128], index: 7, kind: output, shape index: {}]
  %s8 = sld [smem:[#allocation0]]
  $region54: #{tpu_custom_call.1} parent=0
    _
  %s10 = ssub.s32 1, %s8
  %s11 = scalar_select 0, %s10, %s8
  $region1: #{tpu_custom_call.1} parent=0
    #allocation2 [shape = 'u8[12288]{0}', space=vmem, size = 0x3000, scoped, tag = 'input window, operand 0, single buffered']
    #allocation3 [shape = 's32[1]{0}', space=sflag, size = 0x4, scoped, tag = 'scoped memory for tpu_custom_call.1']
    #allocation4 [shape = 's32[1]{0}', space=sflag, size = 0x4, scoped, tag = 'scoped memory for tpu_custom_call.1']
    #allocation5 [shape = 'u8[77824]{0}', space=vmem, size = 0x13000, scoped, tag = 'input window, operand 1, single buffered']
    #allocation6 [shape = 's32[1]{0}', space=sflag, size = 0x4, scoped, tag = 'scoped memory for tpu_custom_call.1']
    #allocation7 [shape = 'u8[32768]{0}', space=vmem, size = 0x8000, scoped, tag = 'input window, operand 3, single buffered']
    #allocation8 [shape = 'u8[32768]{0}', space=vmem, size = 0x8000, scoped, tag = 'input window, operand 5, single buffered']
    #allocation9 [shape = 's32[1]{0}', space=sflag, size = 0x4, scoped, tag = 'scoped memory for tpu_custom_call.1']
    #allocation10 [shape = 'u8[2048]{0}', space=vmem, size = 0x800, scoped, tag = 'output window, operand 0, single buffered']
    %12 = vsyncpa [#allocation3], 0
    %13 = vsyncpa [#allocation6], 0
    %14 = vsyncpa [#allocation9], 0
    %15 = vsyncpa [#allocation4], 0
    // Predicated region
    $region2: #{tpu_custom_call.1} parent=1 // pred_check
      _
    $region3: #{tpu_custom_call.1} parent=1 // pred_check_branch
      %17 = sbr.rel (0) target = $region5
    $region4: #{tpu_custom_call.1} parent=1 // pred_region
      %19 = vsyncadd [#allocation3], 288
      %s20 = sshll.u32 %s0, 4
      %s21 = int_to_ptr.hbm [resolvable:$true] %s20
      %s22 = sshll.u32 [#allocation2], 4
      %s23 = int_to_ptr.vmem [resolvable:$true] %s22
      %28 = dma.hbm_to_vmem [thread:$0]  %s21, 96, %s23, [#allocation3], 96, 96, 6
    $region5: #{tpu_custom_call.1} parent=1 // pred_fallthru
      _
    // Predicated region
    $region6: #{tpu_custom_call.1} parent=1 // pred_check
      _
    $region7: #{tpu_custom_call.1} parent=1 // pred_check_branch
      %30 = sbr.rel (0) target = $region9
    $region8: #{tpu_custom_call.1} parent=1 // pred_region
      %32 = vsyncadd [#allocation6], 0
      %s33 = sshll.u32 %s1, 4
      %s34 = int_to_ptr.hbm [resolvable:$true] %s33
      %s35 = sshll.u32 [#allocation5], 4
      %s36 = int_to_ptr.vmem [resolvable:$true] %s35
      %41 = dma.hbm_to_vmem [thread:$0]  %s34, 2432, %s36, [#allocation6], 64, 64, 4
    $region9: #{tpu_custom_call.1} parent=1 // pred_fallthru
      _
    // Predicated region
    $region10: #{tpu_custom_call.1} parent=1 // pred_check
      _
    $region11: #{tpu_custom_call.1} parent=1 // pred_check_branch
      %43 = sbr.rel (0) target = $region13
    $region12: #{tpu_custom_call.1} parent=1 // pred_region
      _
    $region13: #{tpu_custom_call.1} parent=1 // pred_fallthru
      _
    // Predicated region
    $region14: #{tpu_custom_call.1} parent=1 // pred_check
      _
    $region15: #{tpu_custom_call.1} parent=1 // pred_check_branch
      %45 = sbr.rel (0) target = $region17
    $region16: #{tpu_custom_call.1} parent=1 // pred_region
      %47 = vsyncadd [#allocation6], 0
      %s48 = sshll.u32 %s3, 4
      %s49 = int_to_ptr.hbm [resolvable:$true] %s48
      %s50 = sshll.u32 [#allocation7], 4
      %s51 = int_to_ptr.vmem [resolvable:$true] %s50
      %56 = dma.hbm_to_vmem [thread:$0]  %s49, 1024, %s51, [#allocation6], 64, 64, 4
    $region17: #{tpu_custom_call.1} parent=1 // pred_fallthru
      _
    // Predicated region
    $region18: #{tpu_custom_call.1} parent=1 // pred_check
      _
    $region19: #{tpu_custom_call.1} parent=1 // pred_check_branch
      %58 = sbr.rel (0) target = $region21
    $region20: #{tpu_custom_call.1} parent=1 // pred_region
      _
    $region21: #{tpu_custom_call.1} parent=1 // pred_fallthru
      _
    // Predicated region
    $region22: #{tpu_custom_call.1} parent=1 // pred_check
      _
    $region23: #{tpu_custom_call.1} parent=1 // pred_check_branch
      %60 = sbr.rel (0) target = $region25
    $region24: #{tpu_custom_call.1} parent=1 // pred_region
      %62 = vsyncadd [#allocation9], 0
      %s63 = sshll.u32 %s5, 4
      %s64 = int_to_ptr.hbm [resolvable:$true] %s63
      %s65 = sshll.u32 [#allocation8], 4
      %s66 = int_to_ptr.vmem [resolvable:$true] %s65
      %71 = dma.hbm_to_vmem [thread:$0]  %s64, 1024, %s66, [#allocation9], 64, 64, 4
    $region25: #{tpu_custom_call.1} parent=1 // pred_fallthru
      _
    // Predicated region
    $region26: #{tpu_custom_call.1} parent=1 // pred_check
      _
    $region27: #{tpu_custom_call.1} parent=1 // pred_check_branch
      %73 = sbr.rel (0) target = $region29
    $region28: #{tpu_custom_call.1} parent=1 // pred_region
      _
    $region29: #{tpu_custom_call.1} parent=1 // pred_fallthru
      _
    // Predicated region
    $region30: #{tpu_custom_call.1} parent=1 // pred_check
      _
    $region31: #{tpu_custom_call.1} parent=1 // pred_check_branch
      %75 = sbr.rel (0) target = $region33
    $region32: #{tpu_custom_call.1} parent=1 // pred_region
      %77 = dma.done [#allocation3], 384
    $region33: #{tpu_custom_call.1} parent=1 // pred_fallthru
      _
    // Predicated region
    $region34: #{tpu_custom_call.1} parent=1 // pred_check
      _
    $region35: #{tpu_custom_call.1} parent=1 // pred_check_branch
      %79 = sbr.rel (0) target = $region37
    $region36: #{tpu_custom_call.1} parent=1 // pred_region
      %81 = dma.done [#allocation6], 2432
    $region37: #{tpu_custom_call.1} parent=1 // pred_fallthru
      _
    // Predicated region
    $region38: #{tpu_custom_call.1} parent=1 // pred_check
      _
    $region39: #{tpu_custom_call.1} parent=1 // pred_check_branch
      %83 = sbr.rel (0) target = $region41
    $region40: #{tpu_custom_call.1} parent=1 // pred_region
      %85 = dma.done [#allocation6], 1024
    $region41: #{tpu_custom_call.1} parent=1 // pred_fallthru
      _
    // Predicated region
    $region42: #{tpu_custom_call.1} parent=1 // pred_check
      _
    $region43: #{tpu_custom_call.1} parent=1 // pred_check_branch
      %87 = sbr.rel (0) target = $region45
    $region44: #{tpu_custom_call.1} parent=1 // pred_region
      %89 = dma.done [#allocation9], 1024
    $region45: #{tpu_custom_call.1} parent=1 // pred_fallthru
      _
    %v91 = vld [vmem:[#allocation2] sm:$0x3f]
    %v92 = vld [vmem:[#allocation2 + $0x6] sm:$0x3f]
    %v93 = vld [vmem:[#allocation2 + $0xc] sm:$0x3f]
    %v94 = vld [vmem:[#allocation2 + $0x12] sm:$0x3f]
    %99 = vst [vmem:[#allocation1] ss:$4 sm:$0xff] %v91
    %s100 = scalar_lea.vmem [#allocation1], 1
    %101 = vst [vmem:[%s100] ss:$4 sm:$0xff] %v92
    %s102 = scalar_lea.vmem [#allocation1], 2
    %103 = vst [vmem:[%s102] ss:$4 sm:$0xff] %v93
    %s104 = scalar_lea.vmem [#allocation1], 3
    %105 = vst [vmem:[%s104] ss:$4 sm:$0xff] %v94
    %v106 = vld.sshfl [vmem:[#allocation1] sm:$0xff pattern:$0x73625140]
    %v107 = vld.sshfl [vmem:[#allocation1 + $0x8] sm:$0xff pattern:$0x73625140]
    %v108 = vld.sshfl [vmem:[#allocation1 + $0x10] sm:$0xff pattern:$0x73625140]
    %v112 = vpack.c.bf16 %v106, %v106
    %v113 = vpack.c.bf16 %v107, %v107
    %v114 = vpack.c.bf16 %v108, %v108
    %v115 = vld [vmem:[#allocation5] sm:$0xf]
    %v116 = vld [vmem:[#allocation5 + $0x4] sm:$0xf]
    %v117 = vld [vmem:[#allocation5 + $0x8] sm:$0xf]
    %v118 = vld [vmem:[#allocation5 + $0xc] sm:$0xf]
    %v119 = vld [vmem:[#allocation5 + $0x10] sm:$0xf]
    %v120 = vld [vmem:[#allocation5 + $0x14] sm:$0xf]
    %v121 = vld [vmem:[#allocation5 + $0x18] sm:$0xf]
    %v122 = vld [vmem:[#allocation5 + $0x1c] sm:$0xf]
    %v123 = vld [vmem:[#allocation5 + $0x20] sm:$0xf]
    %v124 = vld [vmem:[#allocation5 + $0x24] sm:$0xf]
    %v125 = vld [vmem:[#allocation5 + $0x28] sm:$0xf]
    %v126 = vld [vmem:[#allocation5 + $0x2c] sm:$0xf]
    %v127 = vld [vmem:[#allocation5 + $0x30] sm:$0xf]
    %v128 = vld [vmem:[#allocation5 + $0x34] sm:$0xf]
    %v129 = vld [vmem:[#allocation5 + $0x38] sm:$0xf]
    %v130 = vld [vmem:[#allocation5 + $0x3c] sm:$0xf]
    %v131 = vld [vmem:[#allocation5 + $0x40] sm:$0xf]
    %v132 = vld [vmem:[#allocation5 + $0x44] sm:$0xf]
    %v133 = vld [vmem:[#allocation5 + $0x48] sm:$0xf]
    %v134 = vld [vmem:[#allocation5 + $0x4c] sm:$0xf]
    %v135 = vld [vmem:[#allocation5 + $0x50] sm:$0xf]
    %v136 = vld [vmem:[#allocation5 + $0x54] sm:$0xf]
    %v137 = vld [vmem:[#allocation5 + $0x58] sm:$0xf]
    %v138 = vld [vmem:[#allocation5 + $0x5c] sm:$0xf]
    %v139 = vld [vmem:[#allocation5 + $0x60] sm:$0xf]
    %v140 = vld [vmem:[#allocation5 + $0x64] sm:$0xf]
    %v141 = vld [vmem:[#allocation5 + $0x68] sm:$0xf]
    %v142 = vld [vmem:[#allocation5 + $0x6c] sm:$0xf]
    %v143 = vld [vmem:[#allocation5 + $0x70] sm:$0xf]
    %v144 = vld [vmem:[#allocation5 + $0x74] sm:$0xf]
    %v145 = vld [vmem:[#allocation5 + $0x78] sm:$0xf]
    %v146 = vld [vmem:[#allocation5 + $0x7c] sm:$0xf]
    %v147 = vld [vmem:[#allocation5 + $0x80] sm:$0xf]
    %v148 = vld [vmem:[#allocation5 + $0x84] sm:$0xf]
    %v149 = vld [vmem:[#allocation5 + $0x88] sm:$0xf]
    %v150 = vld [vmem:[#allocation5 + $0x8c] sm:$0xf]
    %v151 = vld [vmem:[#allocation5 + $0x90] sm:$0xf]
    %v152 = vld [vmem:[#allocation5 + $0x94] sm:$0x3]
    %v153 = vld [vmem:[%s2] sm:$0x1]
    %v155 = vperm.slane %v153, 0
    %v195 = vunpack.c.l.b16 %v115
    %v196 = vunpack.c.l.b16 %v116
    %v197 = vunpack.c.l.b16 %v117
    %v198 = vunpack.c.l.b16 %v118
    %v199 = vunpack.c.l.b16 %v119
    %v200 = vunpack.c.l.b16 %v120
    %v201 = vunpack.c.l.b16 %v121
    %v202 = vunpack.c.l.b16 %v122
    %v203 = vunpack.c.l.b16 %v123
    %v204 = vunpack.c.l.b16 %v124
    %v205 = vunpack.c.l.b16 %v125
    %v206 = vunpack.c.l.b16 %v126
    %v207 = vunpack.c.l.b16 %v127
    %v208 = vunpack.c.l.b16 %v128
    %v209 = vunpack.c.l.b16 %v129
    %v210 = vunpack.c.l.b16 %v130
    %v211 = vunpack.c.l.b16 %v131
    %v212 = vunpack.c.l.b16 %v132
    %v213 = vunpack.c.l.b16 %v133
    %v214 = vunpack.c.l.b16 %v134
    %v215 = vunpack.c.l.b16 %v135
    %v216 = vunpack.c.l.b16 %v136
    %v217 = vunpack.c.l.b16 %v137
    %v218 = vunpack.c.l.b16 %v138
    %v219 = vunpack.c.l.b16 %v139
    %v220 = vunpack.c.l.b16 %v140
    %v221 = vunpack.c.l.b16 %v141
    %v222 = vunpack.c.l.b16 %v142
    %v223 = vunpack.c.l.b16 %v143
    %v224 = vunpack.c.l.b16 %v144
    %v225 = vunpack.c.l.b16 %v145
    %v226 = vunpack.c.l.b16 %v146
    %v227 = vunpack.c.l.b16 %v147
    %v228 = vunpack.c.l.b16 %v148
    %v229 = vunpack.c.l.b16 %v149
    %v230 = vunpack.c.l.b16 %v150
    %v231 = vunpack.c.l.b16 %v151
    %v232 = vunpack.c.l.b16 %v152
    %v233 = vpack.c.b16 %v196, %v195
    %v234 = vpack.c.b16 %v198, %v197
    %v235 = vpack.c.b16 %v200, %v199
    %v236 = vpack.c.b16 %v202, %v201
    %v237 = vpack.c.b16 %v204, %v203
    %v238 = vpack.c.b16 %v206, %v205
    %v239 = vpack.c.b16 %v208, %v207
    %v240 = vpack.c.b16 %v210, %v209
    %v241 = vpack.c.b16 %v212, %v211
    %v242 = vpack.c.b16 %v214, %v213
    %v243 = vpack.c.b16 %v216, %v215
    %v244 = vpack.c.b16 %v218, %v217
    %v245 = vpack.c.b16 %v220, %v219
    %v246 = vpack.c.b16 %v222, %v221
    %v247 = vpack.c.b16 %v224, %v223
    %v248 = vpack.c.b16 %v226, %v225
    %v249 = vpack.c.b16 %v228, %v227
    %v250 = vpack.c.b16 %v230, %v229
    %v251 = vpack.c.b16 %v232, %v231
    %vm270 = vcmask 359424
    %v272 = vsel %vm270, %v114, 0
    %vm274 = vcmask 1045504
    %v276 = vsel %vm274, %v251, 0
    %278 = vmatpush.bf16.msra.mxu0 %v240
    %279 = vmatpush.bf16.msra.mxu0 %v239
    %280 = vmatpush.bf16.msra.mxu0 %v238
    %281 = vmatpush.bf16.msra.mxu0 %v237
    %282 = vmatpush.bf16.msra.mxu0 %v236
    %283 = vmatpush.bf16.msra.mxu0 %v235
    %284 = vmatpush.bf16.msra.mxu0 %v234
    %285 = vmatpush.bf16.msra.mxu0 %v233
    %286 = vmatmul.bf16.gmra.mxu0 %v112
    %v287 = vpop.f32.mrf.mxu0
    %v288 = vadd.f32 %v155, %v287
    %v289 = vpop.f32.mrf.mxu0
    %290 = vdwg.mxu0
    %291 = vmatpush.bf16.msra.mxu0 %v248
    %292 = vmatpush.bf16.msra.mxu0 %v247
    %293 = vmatpush.bf16.msra.mxu0 %v246
    %294 = vmatpush.bf16.msra.mxu0 %v245
    %295 = vmatpush.bf16.msra.mxu0 %v244
    %296 = vmatpush.bf16.msra.mxu0 %v243
    %297 = vmatpush.bf16.msra.mxu0 %v242
    %298 = vmatpush.bf16.msra.mxu0 %v241
    %299 = vmatmul.bf16.gmra.mxu0 %v113
    %v300 = vpop.f32.mrf.mxu0
    %v301 = vadd.f32 %v288, %v300
    %v302 = vpop.f32.mrf.mxu0
    %303 = vdwg.mxu0
    %304 = vmatpush.bf16.msra.mxu0 0
    %305 = vmatpush.bf16.msra.mxu0 0
    %306 = vmatpush.bf16.msra.mxu0 0
    %307 = vmatpush.bf16.msra.mxu0 0
    %308 = vmatpush.bf16.msra.mxu0 0
    %309 = vmatpush.bf16.msra.mxu0 %v276
    %310 = vmatpush.bf16.msra.mxu0 %v250
    %311 = vmatpush.bf16.msra.mxu0 %v249
    %312 = vmatmul.bf16.gmra.mxu0 %v272
    %v313 = vpop.f32.mrf.mxu0
    %v314 = vadd.f32 %v301, %v313
    %v315 = vpop.f32.mrf.mxu0
    %316 = vdwg.mxu0
    %v317 = vmax.f32 %v314, 0.0
    %v318 = vpack.c.bf16 %v317, %v317
    %v319 = vld [vmem:[#allocation7] sm:$0xf]
    %v320 = vld [vmem:[#allocation7 + $0x4] sm:$0xf]
    %v321 = vld [vmem:[#allocation7 + $0x8] sm:$0xf]
    %v322 = vld [vmem:[#allocation7 + $0xc] sm:$0xf]
    %v323 = vld [vmem:[#allocation7 + $0x10] sm:$0xf]
    %v324 = vld [vmem:[#allocation7 + $0x14] sm:$0xf]
    %v325 = vld [vmem:[#allocation7 + $0x18] sm:$0xf]
    %v326 = vld [vmem:[#allocation7 + $0x1c] sm:$0xf]
    %v327 = vld [vmem:[#allocation7 + $0x20] sm:$0xf]
    %v328 = vld [vmem:[#allocation7 + $0x24] sm:$0xf]
    %v329 = vld [vmem:[#allocation7 + $0x28] sm:$0xf]
    %v330 = vld [vmem:[#allocation7 + $0x2c] sm:$0xf]
    %v331 = vld [vmem:[#allocation7 + $0x30] sm:$0xf]
    %v332 = vld [vmem:[#allocation7 + $0x34] sm:$0xf]
    %v333 = vld [vmem:[#allocation7 + $0x38] sm:$0xf]
    %v334 = vld [vmem:[#allocation7 + $0x3c] sm:$0xf]
    %v335 = vld [vmem:[%s4] sm:$0x1]
    %v337 = vperm.slane %v335, 0
    %v355 = vunpack.c.l.b16 %v319
    %v356 = vunpack.c.l.b16 %v320
    %v357 = vunpack.c.l.b16 %v321
    %v358 = vunpack.c.l.b16 %v322
    %v359 = vunpack.c.l.b16 %v323
    %v360 = vunpack.c.l.b16 %v324
    %v361 = vunpack.c.l.b16 %v325
    %v362 = vunpack.c.l.b16 %v326
    %v363 = vunpack.c.l.b16 %v327
    %v364 = vunpack.c.l.b16 %v328
    %v365 = vunpack.c.l.b16 %v329
    %v366 = vunpack.c.l.b16 %v330
    %v367 = vunpack.c.l.b16 %v331
    %v368 = vunpack.c.l.b16 %v332
    %v369 = vunpack.c.l.b16 %v333
    %v370 = vunpack.c.l.b16 %v334
    %v371 = vpack.c.b16 %v356, %v355
    %v372 = vpack.c.b16 %v358, %v357
    %v373 = vpack.c.b16 %v360, %v359
    %v374 = vpack.c.b16 %v362, %v361
    %v375 = vpack.c.b16 %v364, %v363
    %v376 = vpack.c.b16 %v366, %v365
    %v377 = vpack.c.b16 %v368, %v367
    %v378 = vpack.c.b16 %v370, %v369
    %387 = vmatpush.bf16.msra.mxu0 %v378
    %388 = vmatpush.bf16.msra.mxu0 %v377
    %389 = vmatpush.bf16.msra.mxu0 %v376
    %390 = vmatpush.bf16.msra.mxu0 %v375
    %391 = vmatpush.bf16.msra.mxu0 %v374
    %392 = vmatpush.bf16.msra.mxu0 %v373
    %393 = vmatpush.bf16.msra.mxu0 %v372
    %394 = vmatpush.bf16.msra.mxu0 %v371
    %395 = vmatmul.bf16.gmra.mxu0 %v318
    %v396 = vpop.f32.mrf.mxu0
    %v397 = vadd.f32 %v337, %v396
    %v398 = vpop.f32.mrf.mxu0
    %399 = vdwg.mxu0
    %v400 = vmax.f32 %v397, 0.0
    %v401 = vpack.c.bf16 %v400, %v400
    %v402 = vld [vmem:[#allocation8] sm:$0xf]
    %v403 = vld [vmem:[#allocation8 + $0x4] sm:$0xf]
    %v404 = vld [vmem:[#allocation8 + $0x8] sm:$0xf]
    %v405 = vld [vmem:[#allocation8 + $0xc] sm:$0xf]
    %v406 = vld [vmem:[#allocation8 + $0x10] sm:$0xf]
    %v407 = vld [vmem:[#allocation8 + $0x14] sm:$0xf]
    %v408 = vld [vmem:[#allocation8 + $0x18] sm:$0xf]
    %v409 = vld [vmem:[#allocation8 + $0x1c] sm:$0xf]
    %v410 = vld [vmem:[#allocation8 + $0x20] sm:$0xf]
    %v411 = vld [vmem:[#allocation8 + $0x24] sm:$0xf]
    %v412 = vld [vmem:[#allocation8 + $0x28] sm:$0xf]
    %v413 = vld [vmem:[#allocation8 + $0x2c] sm:$0xf]
    %v414 = vld [vmem:[#allocation8 + $0x30] sm:$0xf]
    %v415 = vld [vmem:[#allocation8 + $0x34] sm:$0xf]
    %v416 = vld [vmem:[#allocation8 + $0x38] sm:$0xf]
    %v417 = vld [vmem:[#allocation8 + $0x3c] sm:$0xf]
    %v418 = vld [vmem:[%s6] sm:$0x1]
    %v420 = vperm.slane %v418, 0
    %v438 = vunpack.c.l.b16 %v402
    %v439 = vunpack.c.l.b16 %v403
    %v440 = vunpack.c.l.b16 %v404
    %v441 = vunpack.c.l.b16 %v405
    %v442 = vunpack.c.l.b16 %v406
    %v443 = vunpack.c.l.b16 %v407
    %v444 = vunpack.c.l.b16 %v408
    %v445 = vunpack.c.l.b16 %v409
    %v446 = vunpack.c.l.b16 %v410
    %v447 = vunpack.c.l.b16 %v411
    %v448 = vunpack.c.l.b16 %v412
    %v449 = vunpack.c.l.b16 %v413
    %v450 = vunpack.c.l.b16 %v414
    %v451 = vunpack.c.l.b16 %v415
    %v452 = vunpack.c.l.b16 %v416
    %v453 = vunpack.c.l.b16 %v417
    %v454 = vpack.c.b16 %v439, %v438
    %v455 = vpack.c.b16 %v441, %v440
    %v456 = vpack.c.b16 %v443, %v442
    %v457 = vpack.c.b16 %v445, %v444
    %v458 = vpack.c.b16 %v447, %v446
    %v459 = vpack.c.b16 %v449, %v448
    %v460 = vpack.c.b16 %v451, %v450
    %v461 = vpack.c.b16 %v453, %v452
    %470 = vmatpush.bf16.msra.mxu0 %v461
    %471 = vmatpush.bf16.msra.mxu0 %v460
    %472 = vmatpush.bf16.msra.mxu0 %v459
    %473 = vmatpush.bf16.msra.mxu0 %v458
    %474 = vmatpush.bf16.msra.mxu0 %v457
    %475 = vmatpush.bf16.msra.mxu0 %v456
    %476 = vmatpush.bf16.msra.mxu0 %v455
    %477 = vmatpush.bf16.msra.mxu0 %v454
    %478 = vmatmul.bf16.gmra.mxu0 %v401
    %v479 = vpop.f32.mrf.mxu0
    %v480 = vadd.f32 %v420, %v479
    %v481 = vpop.f32.mrf.mxu0
    %482 = vdwg.mxu0
    %v483 = vpack.c.bf16 %v480, %v480
    %v485 = vrot.slane %v483, 3
    %vm486 = vcmask 1040384
    %v489 = vsel %vm486, %v483, %v485
    %vm490 = vcmask 1041409
    %v491 = vsel %vm490, %v483, %v485
    %v493 = vrot.slane %v491, 1
    %vm494 = vcmask 1042434
    %v495 = vsel %vm494, %v483, %v485
    %v497 = vrot.slane %v495, 2
    %vm498 = vcmask 1043459
    %v499 = vsel %vm498, %v483, %v485
    %v501 = vrot.slane %v499, 3
    %506 = vst [vmem:[#allocation10] sm:$0x1] %v489
    %507 = vst [vmem:[#allocation10 + $0x1] sm:$0x1] %v493
    %508 = vst [vmem:[#allocation10 + $0x2] sm:$0x1] %v497
    %509 = vst [vmem:[#allocation10 + $0x3] sm:$0x1] %v501
    // Predicated region
    $region46: #{tpu_custom_call.1} parent=1 // pred_check
      _
    $region47: #{tpu_custom_call.1} parent=1 // pred_check_branch
      %511 = sbr.rel (0) target = $region49
    $region48: #{tpu_custom_call.1} parent=1 // pred_region
      %513 = vsyncadd [#allocation4], 48
      %s514 = sshll.u32 [#allocation10], 4
      %s515 = int_to_ptr.vmem [resolvable:$true] %s514
      %s516 = sshll.u32 %s7, 4
      %s517 = int_to_ptr.hbm [resolvable:$true] %s516
      %522 = dma.vmem_to_hbm [thread:$0]  %s515, 16, %s517, [#allocation4], 16, 16, 1
    $region49: #{tpu_custom_call.1} parent=1 // pred_fallthru
      _
    // Predicated region
    $region50: #{tpu_custom_call.1} parent=1 // pred_check
      _
    $region51: #{tpu_custom_call.1} parent=1 // pred_check_branch
      %524 = sbr.rel (0) target = $region53
    $region52: #{tpu_custom_call.1} parent=1 // pred_region
      %526 = dma.done [#allocation4], 64
    $region53: #{tpu_custom_call.1} parent=1 // pred_fallthru
      _
    %527 = vsyncpa [#allocation3], 1
    %528 = vsyncpa [#allocation6], 1
    %529 = vsyncpa [#allocation9], 1
    %530 = vsyncpa [#allocation4], 1

</llo_original>
